<compile_context>
chip_gen: v7x
topology: tpu7x:2x2x1
jax: 0.10.0
libtpu: 0.0.40
codegen_flags: <defaults>
</compile_context>

<pallas_src>
import jax
import jax.numpy as jnp
from jax.experimental import pallas as pl
from jax.experimental.pallas import tpu as pltpu

# Logical (PyTorch) sizes.
Z_SIZE = 100
H1 = 32
H2 = 64
OUT = 28 * 28  # 784

# Lane-aligned (padded) sizes.
Z_PAD = 128
H1_PAD = 128
H2_PAD = 128
OUT_PAD = 896  # 7 * 128


def _round_up(x, m):
    return (x + m - 1) // m * m


def generator_kernel(z_ref, w1_ref, b1_ref, w2_ref, b2_ref, w3_ref, b3_ref, o_ref):
    # Layer 1: Linear(100 -> 32) + LeakyReLU(0.2)   (bf16 MXU, f32 accumulate)
    h = jnp.dot(z_ref[...], w1_ref[...], preferred_element_type=jnp.float32)
    h = h + b1_ref[...]
    h = jnp.where(h > 0, h, 0.2 * h)                    # f32 VPU math
    # Layer 2: Linear(32 -> 64) + LeakyReLU(0.2)
    h = jnp.dot(h.astype(jnp.bfloat16), w2_ref[...],
                preferred_element_type=jnp.float32)
    h = h + b2_ref[...]
    h = jnp.where(h > 0, h, 0.2 * h)
    # Layer 3: Linear(64 -> 784) + tanh               (padded cols -> tanh(0)=0)
    h = jnp.dot(h.astype(jnp.bfloat16), w3_ref[...],
                preferred_element_type=jnp.float32)
    h = h + b3_ref[...]
    o_ref[...] = jnp.tanh(h)                            # EUP transcendental


def init_generator_params(key):
    """Deterministic synthetic weights, zero-padded to lane-aligned shapes.

    Weights bf16 (MXU operands), biases f32.  Padded rows/cols are zero so
    padded lanes contribute nothing to the logical output.
    """
    ks = jax.random.split(key, 6)

    def lin(kw, kb, fan_in, fan_out, in_pad, out_pad):
        bound = 1.0 / float(fan_in) ** 0.5
        w = jax.random.uniform(kw, (fan_in, fan_out), jnp.float32, -bound, bound)
        b = jax.random.uniform(kb, (1, fan_out), jnp.float32, -bound, bound)
        w_p = jnp.zeros((in_pad, out_pad), jnp.bfloat16)
        w_p = w_p.at[:fan_in, :fan_out].set(w.astype(jnp.bfloat16))
        b_p = jnp.zeros((1, out_pad), jnp.float32)
        b_p = b_p.at[:, :fan_out].set(b)
        return w_p, b_p

    w1, b1 = lin(ks[0], ks[1], Z_SIZE, H1, Z_PAD, H1_PAD)
    w2, b2 = lin(ks[2], ks[3], H1, H2, H1_PAD, H2_PAD)
    w3, b3 = lin(ks[4], ks[5], H2, OUT, H2_PAD, OUT_PAD)
    return (w1, b1, w2, b2, w3, b3)


def generator_forward(z, params):
    """Batched generator: z (B, 100) f32 -> images (B, 784) f32."""
    w1, b1, w2, b2, w3, b3 = params
    B = z.shape[0]

    # Batch tile: sublane-aligned, capped at 128 MXU rows -> minimal padding.
    TB = min(128, _round_up(B, 8))
    Bp = _round_up(B, TB)

    # Pad batch + feature axis with zeros; bf16 operand for the first matmul.
    z_p = jnp.zeros((Bp, Z_PAD), jnp.float32).at[:B, :Z_SIZE].set(z)
    z_p = z_p.astype(jnp.bfloat16)

    const = lambda i: (0, 0)   # weights/biases VMEM-resident across grid steps
    flat = pl.pallas_call(
        generator_kernel,
        out_shape=jax.ShapeDtypeStruct((Bp, OUT_PAD), jnp.float32),
        grid=(Bp // TB,),
        in_specs=[
            pl.BlockSpec((TB, Z_PAD), lambda i: (i, 0)),
            pl.BlockSpec((Z_PAD, H1_PAD), const),
            pl.BlockSpec((1, H1_PAD), const),
            pl.BlockSpec((H1_PAD, H2_PAD), const),
            pl.BlockSpec((1, H2_PAD), const),
            pl.BlockSpec((H2_PAD, OUT_PAD), const),
            pl.BlockSpec((1, OUT_PAD), const),
        ],
        out_specs=pl.BlockSpec((TB, OUT_PAD), lambda i: (i, 0)),
        compiler_params=pltpu.CompilerParams(
            dimension_semantics=("parallel",),  # shards batch tiles across TCs on v7x
        ),
    )(z_p, w1, b1, w2, b2, w3, b3)

    # Drop batch padding and the zero-padded output columns (896 -> 784).
    return flat[:B, :OUT]


def gan_forward(z, params):
    """Equivalent of GAN.forward: generator(z).view(B, 1, 28, 28) (NCHW)."""
    flat = generator_forward(z, params)
    return flat.reshape(z.shape[0], 1, 28, 28)


def _generator_ref(z, params):
    """Pure-JAX reference using the same (bf16-cast, zero-padded) weights."""
    w1, b1, w2, b2, w3, b3 = params
    zb = jnp.zeros((z.shape[0], Z_PAD), jnp.float32).at[:, :Z_SIZE].set(z)
    zb = zb.astype(jnp.bfloat16).astype(jnp.float32)
    h = zb @ w1.astype(jnp.float32) + b1
    h = jnp.where(h > 0, h, 0.2 * h)
    h = h.astype(jnp.bfloat16).astype(jnp.float32) @ w2.astype(jnp.float32) + b2
    h = jnp.where(h > 0, h, 0.2 * h)
    h = h.astype(jnp.bfloat16).astype(jnp.float32) @ w3.astype(jnp.float32) + b3
    return jnp.tanh(h)[:, :OUT]


if __name__ == "__main__":
    key = jax.random.PRNGKey(0)
    k_params, k_z1, k_zb = jax.random.split(key, 3)
    params = init_generator_params(k_params)

    # Single-sample forward, matching GAN.forward(z) / .view(1, 1, 28, 28).
    z1 = jax.random.uniform(k_z1, (1, Z_SIZE), jnp.float32, -1.0, 1.0)
    img = jax.block_until_ready(gan_forward(z1, params))
    assert img.shape == (1, 1, 28, 28)
    assert img.dtype == jnp.float32
    assert bool(jnp.all(jnp.isfinite(img)))

    # Small batched sample path (same kernel, grid over the batch).
    zb = jax.random.uniform(k_zb, (4, Z_SIZE), jnp.float32, -1.0, 1.0)
    imgs = jax.block_until_ready(generator_forward(zb, params))
    assert imgs.shape == (4, OUT)
    assert bool(jnp.all(jnp.isfinite(imgs)))

    # Numerical check against a pure-JAX reference (same bf16 weights).
    ref = _generator_ref(zb, params)
    assert bool(jnp.allclose(imgs, ref, atol=2e-2, rtol=2e-2))

    print("KERNEL_OK")
</pallas_src>

<mosaic_0001>
module attributes {stable_mosaic.version = 11 : i64} {
  func.func @generator_kernel(%arg0: i32, %arg1: memref<8x128xbf16, #tpu.memory_space<vmem>>, %arg2: memref<128x128xbf16, #tpu.memory_space<vmem>>, %arg3: memref<1x128xf32, #tpu.memory_space<vmem>>, %arg4: memref<128x128xbf16, #tpu.memory_space<vmem>>, %arg5: memref<1x128xf32, #tpu.memory_space<vmem>>, %arg6: memref<128x896xbf16, #tpu.memory_space<vmem>>, %arg7: memref<1x896xf32, #tpu.memory_space<vmem>>, %arg8: memref<8x896xf32, #tpu.memory_space<vmem>>) attributes {dimension_semantics = [#tpu.dimension_semantics<parallel>], iteration_bounds = array<i64: 1>, scalar_prefetch = 0 : i64, scratch_operands = 0 : i64, tpu.core_type = #tpu.core_type<tc>, window_params = [{transform_indices = @transform_0, window_bounds = array<i64: 8, 128>}, {pipeline_mode = #tpu.pipeline_mode<synchronous>, transform_indices = @transform_1, window_bounds = array<i64: 128, 128>}, {pipeline_mode = #tpu.pipeline_mode<synchronous>, transform_indices = @transform_2, window_bounds = array<i64: 1, 128>}, {pipeline_mode = #tpu.pipeline_mode<synchronous>, transform_indices = @transform_3, window_bounds = array<i64: 128, 128>}, {pipeline_mode = #tpu.pipeline_mode<synchronous>, transform_indices = @transform_4, window_bounds = array<i64: 1, 128>}, {pipeline_mode = #tpu.pipeline_mode<synchronous>, transform_indices = @transform_5, window_bounds = array<i64: 128, 896>}, {pipeline_mode = #tpu.pipeline_mode<synchronous>, transform_indices = @transform_6, window_bounds = array<i64: 1, 896>}, {transform_indices = @transform_7, window_bounds = array<i64: 8, 896>}]} {
    %c0 = arith.constant 0 : index
    %c0_0 = arith.constant 0 : index
    %0 = vector.load %arg1[%c0, %c0_0] : memref<8x128xbf16, #tpu.memory_space<vmem>>, vector<8x128xbf16>
    %c0_1 = arith.constant 0 : index
    %c0_2 = arith.constant 0 : index
    %1 = vector.load %arg2[%c0_1, %c0_2] : memref<128x128xbf16, #tpu.memory_space<vmem>>, vector<128x128xbf16>
    %cst = arith.constant dense<0.000000e+00> : vector<8x128xf32>
    %2 = tpu.matmul %0, %1, %cst {dimension_numbers = #tpu.dot_dimension_numbers<[1], [0], [0], [1], [0, 0, 1, 1], [], []>} : vector<8x128xbf16>, vector<128x128xbf16>, vector<8x128xf32> -> vector<8x128xf32>
    %c0_3 = arith.constant 0 : index
    %c0_4 = arith.constant 0 : index
    %3 = vector.load %arg3[%c0_3, %c0_4] : memref<1x128xf32, #tpu.memory_space<vmem>>, vector<1x128xf32>
    %4 = vector.broadcast %3 : vector<1x128xf32> to vector<8x128xf32>
    %5 = arith.addf %2, %4 : vector<8x128xf32>
    %cst_5 = arith.constant 0.000000e+00 : f32
    %6 = vector.broadcast %cst_5 : f32 to vector<8x128xf32>
    %7 = arith.cmpf ogt, %5, %6 : vector<8x128xf32>
    %cst_6 = arith.constant 2.000000e-01 : f32
    %8 = vector.broadcast %cst_6 : f32 to vector<8x128xf32>
    %9 = arith.mulf %8, %5 : vector<8x128xf32>
    %10 = arith.select %7, %5, %9 : vector<8x128xi1>, vector<8x128xf32>
    %11 = arith.truncf %10 : vector<8x128xf32> to vector<8x128xbf16>
    %c0_7 = arith.constant 0 : index
    %c0_8 = arith.constant 0 : index
    %12 = vector.load %arg4[%c0_7, %c0_8] : memref<128x128xbf16, #tpu.memory_space<vmem>>, vector<128x128xbf16>
    %cst_9 = arith.constant dense<0.000000e+00> : vector<8x128xf32>
    %13 = tpu.matmul %11, %12, %cst_9 {dimension_numbers = #tpu.dot_dimension_numbers<[1], [0], [0], [1], [0, 0, 1, 1], [], []>} : vector<8x128xbf16>, vector<128x128xbf16>, vector<8x128xf32> -> vector<8x128xf32>
    %c0_10 = arith.constant 0 : index
    %c0_11 = arith.constant 0 : index
    %14 = vector.load %arg5[%c0_10, %c0_11] : memref<1x128xf32, #tpu.memory_space<vmem>>, vector<1x128xf32>
    %15 = vector.broadcast %14 : vector<1x128xf32> to vector<8x128xf32>
    %16 = arith.addf %13, %15 : vector<8x128xf32>
    %cst_12 = arith.constant 0.000000e+00 : f32
    %17 = vector.broadcast %cst_12 : f32 to vector<8x128xf32>
    %18 = arith.cmpf ogt, %16, %17 : vector<8x128xf32>
    %cst_13 = arith.constant 2.000000e-01 : f32
    %19 = vector.broadcast %cst_13 : f32 to vector<8x128xf32>
    %20 = arith.mulf %19, %16 : vector<8x128xf32>
    %21 = arith.select %18, %16, %20 : vector<8x128xi1>, vector<8x128xf32>
    %22 = arith.truncf %21 : vector<8x128xf32> to vector<8x128xbf16>
    %c0_14 = arith.constant 0 : index
    %c0_15 = arith.constant 0 : index
    %23 = vector.load %arg6[%c0_14, %c0_15] : memref<128x896xbf16, #tpu.memory_space<vmem>>, vector<128x896xbf16>
    %cst_16 = arith.constant dense<0.000000e+00> : vector<8x896xf32>
    %24 = tpu.matmul %22, %23, %cst_16 {dimension_numbers = #tpu.dot_dimension_numbers<[1], [0], [0], [1], [0, 0, 1, 1], [], []>} : vector<8x128xbf16>, vector<128x896xbf16>, vector<8x896xf32> -> vector<8x896xf32>
    %c0_17 = arith.constant 0 : index
    %c0_18 = arith.constant 0 : index
    %25 = vector.load %arg7[%c0_17, %c0_18] : memref<1x896xf32, #tpu.memory_space<vmem>>, vector<1x896xf32>
    %26 = vector.broadcast %25 : vector<1x896xf32> to vector<8x896xf32>
    %27 = arith.addf %24, %26 : vector<8x896xf32>
    %28 = math.tanh %27 : vector<8x896xf32>
    %c0_19 = arith.constant 0 : index
    %c0_20 = arith.constant 0 : index
    %29 = vector.load %arg8[%c0_19, %c0_20] : memref<8x896xf32, #tpu.memory_space<vmem>>, vector<8x896xf32>
    tpu.vector_store %arg8[%c0_19, %c0_20], %28 {strides = array<i32>} : memref<8x896xf32, #tpu.memory_space<vmem>>, vector<8x896xf32>,
    return
  }
  func.func @transform_0(%arg0: i32) -> (i32, i32) {
    %c0_i32 = arith.constant 0 : i32
    %c0_i32_0 = arith.constant 0 : i32
    return %arg0, %c0_i32 : i32, i32
  }
  func.func @transform_1(%arg0: i32) -> (i32, i32) {
    %c0_i32 = arith.constant 0 : i32
    %c0_i32_0 = arith.constant 0 : i32
    %c0_i32_1 = arith.constant 0 : i32
    return %c0_i32, %c0_i32_0 : i32, i32
  }
  func.func @transform_2(%arg0: i32) -> (i32, i32) {
    %c0_i32 = arith.constant 0 : i32
    %c0_i32_0 = arith.constant 0 : i32
    %c0_i32_1 = arith.constant 0 : i32
    return %c0_i32, %c0_i32_0 : i32, i32
  }
  func.func @transform_3(%arg0: i32) -> (i32, i32) {
    %c0_i32 = arith.constant 0 : i32
    %c0_i32_0 = arith.constant 0 : i32
    %c0_i32_1 = arith.constant 0 : i32
    return %c0_i32, %c0_i32_0 : i32, i32
  }
  func.func @transform_4(%arg0: i32) -> (i32, i32) {
    %c0_i32 = arith.constant 0 : i32
    %c0_i32_0 = arith.constant 0 : i32
    %c0_i32_1 = arith.constant 0 : i32
    return %c0_i32, %c0_i32_0 : i32, i32
  }
  func.func @transform_5(%arg0: i32) -> (i32, i32) {
    %c0_i32 = arith.constant 0 : i32
    %c0_i32_0 = arith.constant 0 : i32
    %c0_i32_1 = arith.constant 0 : i32
    return %c0_i32, %c0_i32_0 : i32, i32
  }
  func.func @transform_6(%arg0: i32) -> (i32, i32) {
    %c0_i32 = arith.constant 0 : i32
    %c0_i32_0 = arith.constant 0 : i32
    %c0_i32_1 = arith.constant 0 : i32
    return %c0_i32, %c0_i32_0 : i32, i32
  }
  func.func @transform_7(%arg0: i32) -> (i32, i32) {
    %c0_i32 = arith.constant 0 : i32
    %c0_i32_0 = arith.constant 0 : i32
    return %arg0, %c0_i32 : i32, i32
  }
}

</mosaic_0001>

<llo_original>
// kernel: tpu_custom_call.1
$region0: #{tpu_custom_call.1}
  #allocation0 [shape = 'u32[]', space=smem, size = 0x4, offset = 0x4, fixed_abs, tag = 'smem constant byte address 0x4 - core index']
  #allocation1 [shape = 'u32[144,128]{1,0:T(1,128)}', space=vmem, size = 0x12000, scoped, tag = 'internal scratch']
  %s0 = inlined_call_operand.hbm [shape: bf16[8,128], index: 0, kind: input, shape index: {}]
  %s1 = inlined_call_operand.hbm [shape: bf16[128,128], index: 1, kind: input, shape index: {}]
  %s2 = inlined_call_operand.vmem [shape: f32[1,128], index: 2, kind: input, shape index: {}]
  %s3 = inlined_call_operand.hbm [shape: bf16[128,128], index: 3, kind: input, shape index: {}]
  %s4 = inlined_call_operand.vmem [shape: f32[1,128], index: 4, kind: input, shape index: {}]
  %s5 = inlined_call_operand.hbm [shape: bf16[128,896], index: 5, kind: input, shape index: {}]
  %s6 = inlined_call_operand.vmem [shape: f32[1,896], index: 6, kind: input, shape index: {}]
  %s7 = inlined_call_operand.hbm [shape: f32[8,896], index: 7, kind: output, shape index: {}]
  %s8 = sld [smem:[#allocation0]]
  $region54: #{tpu_custom_call.1} parent=0
    _
  %s10 = ssub.s32 1, %s8
  %s11 = scalar_select 0, %s10, %s8
  $region1: #{tpu_custom_call.1} parent=0
    #allocation2 [shape = 'u8[2048]{0}', space=vmem, size = 0x800, scoped, tag = 'input window, operand 0, single buffered']
    #allocation3 [shape = 's32[1]{0}', space=sflag, size = 0x4, scoped, tag = 'scoped memory for tpu_custom_call.1']
    #allocation4 [shape = 's32[1]{0}', space=sflag, size = 0x4, scoped, tag = 'scoped memory for tpu_custom_call.1']
    #allocation5 [shape = 'u8[32768]{0}', space=vmem, size = 0x8000, scoped, tag = 'input window, operand 1, single buffered']
    #allocation6 [shape = 's32[1]{0}', space=sflag, size = 0x4, scoped, tag = 'scoped memory for tpu_custom_call.1']
    #allocation7 [shape = 'u8[32768]{0}', space=vmem, size = 0x8000, scoped, tag = 'input window, operand 3, single buffered']
    #allocation8 [shape = 'u8[229376]{0}', space=vmem, size = 0x38000, scoped, tag = 'input window, operand 5, single buffered']
    #allocation9 [shape = 's32[1]{0}', space=sflag, size = 0x4, scoped, tag = 'scoped memory for tpu_custom_call.1']
    #allocation10 [shape = 'u8[28672]{0}', space=vmem, size = 0x7000, scoped, tag = 'output window, operand 0, single buffered']
    %12 = vsyncpa [#allocation3], 0
    %13 = vsyncpa [#allocation6], 0
    %14 = vsyncpa [#allocation9], 0
    %15 = vsyncpa [#allocation4], 0
    // Predicated region
    $region2: #{tpu_custom_call.1} parent=1 // pred_check
      _
    $region3: #{tpu_custom_call.1} parent=1 // pred_check_branch
      %17 = sbr.rel (0) target = $region5
    $region4: #{tpu_custom_call.1} parent=1 // pred_region
      %s19 = ssub.s32 64, 64
      %20 = vsyncadd [#allocation3], %s19
      %s22 = sshll.u32 [#allocation2], 4
      %s23 = int_to_ptr.vmem [resolvable:$true] %s22
      %25 = dma.hbm_to_vmem [thread:$0]  %s0, 64, %s23, [#allocation3]
    $region5: #{tpu_custom_call.1} parent=1 // pred_fallthru
      _
    // Predicated region
    $region6: #{tpu_custom_call.1} parent=1 // pred_check
      _
    $region7: #{tpu_custom_call.1} parent=1 // pred_check_branch
      %27 = sbr.rel (0) target = $region9
    $region8: #{tpu_custom_call.1} parent=1 // pred_region
      %s29 = ssub.s32 1024, 1024
      %30 = vsyncadd [#allocation6], %s29
      %s31 = sshll.u32 [#allocation5], 4
      %s32 = int_to_ptr.vmem [resolvable:$true] %s31
      %37 = dma.hbm_to_vmem [thread:$0]  %s1, 1024, %s32, [#allocation6], 64, 64, 4
    $region9: #{tpu_custom_call.1} parent=1 // pred_fallthru
      _
    // Predicated region
    $region10: #{tpu_custom_call.1} parent=1 // pred_check
      _
    $region11: #{tpu_custom_call.1} parent=1 // pred_check_branch
      %39 = sbr.rel (0) target = $region13
    $region12: #{tpu_custom_call.1} parent=1 // pred_region
      _
    $region13: #{tpu_custom_call.1} parent=1 // pred_fallthru
      _
    // Predicated region
    $region14: #{tpu_custom_call.1} parent=1 // pred_check
      _
    $region15: #{tpu_custom_call.1} parent=1 // pred_check_branch
      %41 = sbr.rel (0) target = $region17
    $region16: #{tpu_custom_call.1} parent=1 // pred_region
      %s43 = ssub.s32 1024, 1024
      %44 = vsyncadd [#allocation6], %s43
      %s45 = sshll.u32 [#allocation7], 4
      %s46 = int_to_ptr.vmem [resolvable:$true] %s45
      %51 = dma.hbm_to_vmem [thread:$0]  %s3, 1024, %s46, [#allocation6], 64, 64, 4
    $region17: #{tpu_custom_call.1} parent=1 // pred_fallthru
      _
    // Predicated region
    $region18: #{tpu_custom_call.1} parent=1 // pred_check
      _
    $region19: #{tpu_custom_call.1} parent=1 // pred_check_branch
      %53 = sbr.rel (0) target = $region21
    $region20: #{tpu_custom_call.1} parent=1 // pred_region
      _
    $region21: #{tpu_custom_call.1} parent=1 // pred_fallthru
      _
    // Predicated region
    $region22: #{tpu_custom_call.1} parent=1 // pred_check
      _
    $region23: #{tpu_custom_call.1} parent=1 // pred_check_branch
      %55 = sbr.rel (0) target = $region25
    $region24: #{tpu_custom_call.1} parent=1 // pred_region
      %s57 = ssub.s32 7168, 7168
      %58 = vsyncadd [#allocation9], %s57
      %s59 = sshll.u32 [#allocation8], 4
      %s60 = int_to_ptr.vmem [resolvable:$true] %s59
      %65 = dma.hbm_to_vmem [thread:$0]  %s5, 7168, %s60, [#allocation9], 448, 448, 28
    $region25: #{tpu_custom_call.1} parent=1 // pred_fallthru
      _
    // Predicated region
    $region26: #{tpu_custom_call.1} parent=1 // pred_check
      _
    $region27: #{tpu_custom_call.1} parent=1 // pred_check_branch
      %67 = sbr.rel (0) target = $region29
    $region28: #{tpu_custom_call.1} parent=1 // pred_region
      _
    $region29: #{tpu_custom_call.1} parent=1 // pred_fallthru
      _
    // Predicated region
    $region30: #{tpu_custom_call.1} parent=1 // pred_check
      _
    $region31: #{tpu_custom_call.1} parent=1 // pred_check_branch
      %69 = sbr.rel (0) target = $region33
    $region32: #{tpu_custom_call.1} parent=1 // pred_region
      %70 = dma.done [#allocation3], 64
    $region33: #{tpu_custom_call.1} parent=1 // pred_fallthru
      _
    // Predicated region
    $region34: #{tpu_custom_call.1} parent=1 // pred_check
      _
    $region35: #{tpu_custom_call.1} parent=1 // pred_check_branch
      %72 = sbr.rel (0) target = $region37
    $region36: #{tpu_custom_call.1} parent=1 // pred_region
      %73 = dma.done [#allocation6], 1024
    $region37: #{tpu_custom_call.1} parent=1 // pred_fallthru
      _
    // Predicated region
    $region38: #{tpu_custom_call.1} parent=1 // pred_check
      _
    $region39: #{tpu_custom_call.1} parent=1 // pred_check_branch
      %75 = sbr.rel (0) target = $region41
    $region40: #{tpu_custom_call.1} parent=1 // pred_region
      %76 = dma.done [#allocation6], 1024
    $region41: #{tpu_custom_call.1} parent=1 // pred_fallthru
      _
    // Predicated region
    $region42: #{tpu_custom_call.1} parent=1 // pred_check
      _
    $region43: #{tpu_custom_call.1} parent=1 // pred_check_branch
      %78 = sbr.rel (0) target = $region45
    $region44: #{tpu_custom_call.1} parent=1 // pred_region
      %79 = dma.done [#allocation9], 7168
    $region45: #{tpu_custom_call.1} parent=1 // pred_fallthru
      _
    %v81 = vld [vmem:[#allocation2] sm:$0xf]
    %v82 = vld [vmem:[#allocation5] sm:$0xf]
    %v83 = vld [vmem:[#allocation5 + $0x4] sm:$0xf]
    %v84 = vld [vmem:[#allocation5 + $0x8] sm:$0xf]
    %v85 = vld [vmem:[#allocation5 + $0xc] sm:$0xf]
    %v86 = vld [vmem:[#allocation5 + $0x10] sm:$0xf]
    %v87 = vld [vmem:[#allocation5 + $0x14] sm:$0xf]
    %v88 = vld [vmem:[#allocation5 + $0x18] sm:$0xf]
    %v89 = vld [vmem:[#allocation5 + $0x1c] sm:$0xf]
    %v90 = vld [vmem:[#allocation5 + $0x20] sm:$0xf]
    %v91 = vld [vmem:[#allocation5 + $0x24] sm:$0xf]
    %v92 = vld [vmem:[#allocation5 + $0x28] sm:$0xf]
    %v93 = vld [vmem:[#allocation5 + $0x2c] sm:$0xf]
    %v94 = vld [vmem:[#allocation5 + $0x30] sm:$0xf]
    %v95 = vld [vmem:[#allocation5 + $0x34] sm:$0xf]
    %v96 = vld [vmem:[#allocation5 + $0x38] sm:$0xf]
    %v97 = vld [vmem:[#allocation5 + $0x3c] sm:$0xf]
    %v98 = vld [vmem:[%s2] sm:$0x1]
    %v100 = vlaneseq
    %v101 = vshrl.u32 %v100, 7
    %v102 = vsub.s32 0, %v101
    %v103 = vrot.slane %v98, %v102
    %v121 = vunpack.c.l.b16 %v82
    %v122 = vunpack.c.l.b16 %v83
    %v123 = vunpack.c.l.b16 %v84
    %v124 = vunpack.c.l.b16 %v85
    %v125 = vunpack.c.l.b16 %v86
    %v126 = vunpack.c.l.b16 %v87
    %v127 = vunpack.c.l.b16 %v88
    %v128 = vunpack.c.l.b16 %v89
    %v129 = vunpack.c.l.b16 %v90
    %v130 = vunpack.c.l.b16 %v91
    %v131 = vunpack.c.l.b16 %v92
    %v132 = vunpack.c.l.b16 %v93
    %v133 = vunpack.c.l.b16 %v94
    %v134 = vunpack.c.l.b16 %v95
    %v135 = vunpack.c.l.b16 %v96
    %v136 = vunpack.c.l.b16 %v97
    %v137 = vpack.c.b16 %v122, %v121
    %v138 = vpack.c.b16 %v124, %v123
    %v139 = vpack.c.b16 %v126, %v125
    %v140 = vpack.c.b16 %v128, %v127
    %v141 = vpack.c.b16 %v130, %v129
    %v142 = vpack.c.b16 %v132, %v131
    %v143 = vpack.c.b16 %v134, %v133
    %v144 = vpack.c.b16 %v136, %v135
    %153 = vmatprep.subr.bf16.mxu0 0
    %154 = vmatpush1.bf16.msra.mxu0 %v137
    %155 = vmatprep.subr.bf16.mxu0 0
    %156 = vmatpush1.bf16.msra.mxu0 %v138
    %157 = vmatprep.subr.bf16.mxu0 0
    %158 = vmatpush1.bf16.msra.mxu0 %v139
    %159 = vmatprep.subr.bf16.mxu0 0
    %160 = vmatpush1.bf16.msra.mxu0 %v140
    %161 = vmatprep.subr.bf16.mxu0 0
    %162 = vmatpush1.bf16.msra.mxu0 %v141
    %163 = vmatprep.subr.bf16.mxu0 0
    %164 = vmatpush1.bf16.msra.mxu0 %v142
    %165 = vmatprep.subr.bf16.mxu0 0
    %166 = vmatpush1.bf16.msra.mxu0 %v143
    %167 = vmatprep.subr.bf16.mxu0 0
    %168 = vmatpush1.bf16.msra.mxu0 %v144
    %169 = vmatprep.subr.bf16.mxu0 0
    %170 = vmatpush1.bf16.msra.mxu0 0
    %171 = vmatprep.subr.bf16.mxu0 0
    %172 = vmatpush1.bf16.msra.mxu0 0
    %173 = vmatprep.subr.bf16.mxu0 0
    %174 = vmatpush1.bf16.msra.mxu0 0
    %175 = vmatprep.subr.bf16.mxu0 0
    %176 = vmatpush1.bf16.msra.mxu0 0
    %177 = vmatprep.subr.bf16.mxu0 0
    %178 = vmatpush1.bf16.msra.mxu0 0
    %179 = vmatprep.subr.bf16.mxu0 0
    %180 = vmatpush1.bf16.msra.mxu0 0
    %181 = vmatprep.subr.bf16.mxu0 0
    %182 = vmatpush1.bf16.msra.mxu0 0
    %183 = vmatprep.subr.bf16.mxu0 0
    %184 = vmatpush1.bf16.msra.mxu0 0
    %185 = vmatprep.mubr.bf16.mxu0 0
    %186 = vmatmul.mubr.bf16.gmra.mrb[0].mxu0 %v81
    %v187 = vpop.f32.mrb[0].mxu0
    %v188 = vadd.f32 %v103, %v187
    %v189 = vpop.f32.mrb[0].mxu0
    %v190 = vpop.f32.mrb[0].mxu0
    %v191 = vpop.f32.mrb[0].mxu0
    %192 = vdwg.mxu0
    %vm193 = vcmp.gt.f32.partialorder %v188, 0.0
    %v194 = vmul.f32 %v188, 0.2
    %v195 = vsel %vm193, %v188, %v194
    %v196 = vpack.c.bf16 %v195, %v195
    %v197 = vld [vmem:[#allocation7] sm:$0xf]
    %v198 = vld [vmem:[#allocation7 + $0x4] sm:$0xf]
    %v199 = vld [vmem:[#allocation7 + $0x8] sm:$0xf]
    %v200 = vld [vmem:[#allocation7 + $0xc] sm:$0xf]
    %v201 = vld [vmem:[#allocation7 + $0x10] sm:$0xf]
    %v202 = vld [vmem:[#allocation7 + $0x14] sm:$0xf]
    %v203 = vld [vmem:[#allocation7 + $0x18] sm:$0xf]
    %v204 = vld [vmem:[#allocation7 + $0x1c] sm:$0xf]
    %v205 = vld [vmem:[#allocation7 + $0x20] sm:$0xf]
    %v206 = vld [vmem:[#allocation7 + $0x24] sm:$0xf]
    %v207 = vld [vmem:[#allocation7 + $0x28] sm:$0xf]
    %v208 = vld [vmem:[#allocation7 + $0x2c] sm:$0xf]
    %v209 = vld [vmem:[#allocation7 + $0x30] sm:$0xf]
    %v210 = vld [vmem:[#allocation7 + $0x34] sm:$0xf]
    %v211 = vld [vmem:[#allocation7 + $0x38] sm:$0xf]
    %v212 = vld [vmem:[#allocation7 + $0x3c] sm:$0xf]
    %v213 = vld [vmem:[%s4] sm:$0x1]
    %v215 = vlaneseq
    %v216 = vshrl.u32 %v215, 7
    %v217 = vsub.s32 0, %v216
    %v218 = vrot.slane %v213, %v217
    %v236 = vunpack.c.l.b16 %v197
    %v237 = vunpack.c.l.b16 %v198
    %v238 = vunpack.c.l.b16 %v199
    %v239 = vunpack.c.l.b16 %v200
    %v240 = vunpack.c.l.b16 %v201
    %v241 = vunpack.c.l.b16 %v202
    %v242 = vunpack.c.l.b16 %v203
    %v243 = vunpack.c.l.b16 %v204
    %v244 = vunpack.c.l.b16 %v205
    %v245 = vunpack.c.l.b16 %v206
    %v246 = vunpack.c.l.b16 %v207
    %v247 = vunpack.c.l.b16 %v208
    %v248 = vunpack.c.l.b16 %v209
    %v249 = vunpack.c.l.b16 %v210
    %v250 = vunpack.c.l.b16 %v211
    %v251 = vunpack.c.l.b16 %v212
    %v252 = vpack.c.b16 %v237, %v236
    %v253 = vpack.c.b16 %v239, %v238
    %v254 = vpack.c.b16 %v241, %v240
    %v255 = vpack.c.b16 %v243, %v242
    %v256 = vpack.c.b16 %v245, %v244
    %v257 = vpack.c.b16 %v247, %v246
    %v258 = vpack.c.b16 %v249, %v248
    %v259 = vpack.c.b16 %v251, %v250
    %268 = vmatprep.subr.bf16.mxu0 0
    %269 = vmatpush1.bf16.msra.mxu0 %v252
    %270 = vmatprep.subr.bf16.mxu0 0
    %271 = vmatpush1.bf16.msra.mxu0 %v253
    %272 = vmatprep.subr.bf16.mxu0 0
    %273 = vmatpush1.bf16.msra.mxu0 %v254
    %274 = vmatprep.subr.bf16.mxu0 0
    %275 = vmatpush1.bf16.msra.mxu0 %v255
    %276 = vmatprep.subr.bf16.mxu0 0
    %277 = vmatpush1.bf16.msra.mxu0 %v256
    %278 = vmatprep.subr.bf16.mxu0 0
    %279 = vmatpush1.bf16.msra.mxu0 %v257
    %280 = vmatprep.subr.bf16.mxu0 0
    %281 = vmatpush1.bf16.msra.mxu0 %v258
    %282 = vmatprep.subr.bf16.mxu0 0
    %283 = vmatpush1.bf16.msra.mxu0 %v259
    %284 = vmatprep.subr.bf16.mxu0 0
    %285 = vmatpush1.bf16.msra.mxu0 0
    %286 = vmatprep.subr.bf16.mxu0 0
    %287 = vmatpush1.bf16.msra.mxu0 0
    %288 = vmatprep.subr.bf16.mxu0 0
    %289 = vmatpush1.bf16.msra.mxu0 0
    %290 = vmatprep.subr.bf16.mxu0 0
    %291 = vmatpush1.bf16.msra.mxu0 0
    %292 = vmatprep.subr.bf16.mxu0 0
    %293 = vmatpush1.bf16.msra.mxu0 0
    %294 = vmatprep.subr.bf16.mxu0 0
    %295 = vmatpush1.bf16.msra.mxu0 0
    %296 = vmatprep.subr.bf16.mxu0 0
    %297 = vmatpush1.bf16.msra.mxu0 0
    %298 = vmatprep.subr.bf16.mxu0 0
    %299 = vmatpush1.bf16.msra.mxu0 0
    %300 = vmatprep.mubr.bf16.mxu0 0
    %301 = vmatmul.mubr.bf16.gmra.mrb[0].mxu0 %v196
    %v302 = vpop.f32.mrb[0].mxu0
    %v303 = vadd.f32 %v218, %v302
    %v304 = vpop.f32.mrb[0].mxu0
    %v305 = vpop.f32.mrb[0].mxu0
    %v306 = vpop.f32.mrb[0].mxu0
    %307 = vdwg.mxu0
    %vm308 = vcmp.gt.f32.partialorder %v303, 0.0
    %v309 = vmul.f32 %v303, 0.2
    %v310 = vsel %vm308, %v303, %v309
    %v311 = vpack.c.bf16 %v310, %v310
    %v312 = vld [vmem:[#allocation8] sm:$0xff]
    %v313 = vld [vmem:[#allocation8 + $0x8] sm:$0xff]
    %v314 = vld [vmem:[#allocation8 + $0x10] sm:$0xff]
    %v315 = vld [vmem:[#allocation8 + $0x18] sm:$0xf]
    %v316 = vld [vmem:[#allocation8 + $0x1c] sm:$0xff]
    %v317 = vld [vmem:[#allocation8 + $0x24] sm:$0xff]
    %v318 = vld [vmem:[#allocation8 + $0x2c] sm:$0xff]
    %v319 = vld [vmem:[#allocation8 + $0x34] sm:$0xf]
    %v320 = vld [vmem:[#allocation8 + $0x38] sm:$0xff]
    %v321 = vld [vmem:[#allocation8 + $0x40] sm:$0xff]
    %v322 = vld [vmem:[#allocation8 + $0x48] sm:$0xff]
    %v323 = vld [vmem:[#allocation8 + $0x50] sm:$0xf]
    %v324 = vld [vmem:[#allocation8 + $0x54] sm:$0xff]
    %v325 = vld [vmem:[#allocation8 + $0x5c] sm:$0xff]
    %v326 = vld [vmem:[#allocation8 + $0x64] sm:$0xff]
    %v327 = vld [vmem:[#allocation8 + $0x6c] sm:$0xf]
    %v328 = vld [vmem:[#allocation8 + $0x70] sm:$0xff]
    %v329 = vld [vmem:[#allocation8 + $0x78] sm:$0xff]
    %v330 = vld [vmem:[#allocation8 + $0x80] sm:$0xff]
    %v331 = vld [vmem:[#allocation8 + $0x88] sm:$0xf]
    %v332 = vld [vmem:[#allocation8 + $0x8c] sm:$0xff]
    %v333 = vld [vmem:[#allocation8 + $0x94] sm:$0xff]
    %v334 = vld [vmem:[#allocation8 + $0x9c] sm:$0xff]
    %v335 = vld [vmem:[#allocation8 + $0xa4] sm:$0xf]
    %v336 = vld [vmem:[#allocation8 + $0xa8] sm:$0xff]
    %v337 = vld [vmem:[#allocation8 + $0xb0] sm:$0xff]
    %v338 = vld [vmem:[#allocation8 + $0xb8] sm:$0xff]
    %v339 = vld [vmem:[#allocation8 + $0xc0] sm:$0xf]
    %v340 = vld [vmem:[#allocation8 + $0xc4] sm:$0xff]
    %v341 = vld [vmem:[#allocation8 + $0xcc] sm:$0xff]
    %v342 = vld [vmem:[#allocation8 + $0xd4] sm:$0xff]
    %v343 = vld [vmem:[#allocation8 + $0xdc] sm:$0xf]
    %v344 = vld [vmem:[#allocation8 + $0xe0] sm:$0xff]
    %v345 = vld [vmem:[#allocation8 + $0xe8] sm:$0xff]
    %v346 = vld [vmem:[#allocation8 + $0xf0] sm:$0xff]
    %v347 = vld [vmem:[#allocation8 + $0xf8] sm:$0xf]
    %v348 = vld [vmem:[#allocation8 + $0xfc] sm:$0xff]
    %v349 = vld [vmem:[#allocation8 + $0x104] sm:$0xff]
    %v350 = vld [vmem:[#allocation8 + $0x10c] sm:$0xff]
    %v351 = vld [vmem:[#allocation8 + $0x114] sm:$0xf]
    %v352 = vld [vmem:[#allocation8 + $0x118] sm:$0xff]
    %v353 = vld [vmem:[#allocation8 + $0x120] sm:$0xff]
    %v354 = vld [vmem:[#allocation8 + $0x128] sm:$0xff]
    %v355 = vld [vmem:[#allocation8 + $0x130] sm:$0xf]
    %v356 = vld [vmem:[#allocation8 + $0x134] sm:$0xff]
    %v357 = vld [vmem:[#allocation8 + $0x13c] sm:$0xff]
    %v358 = vld [vmem:[#allocation8 + $0x144] sm:$0xff]
    %v359 = vld [vmem:[#allocation8 + $0x14c] sm:$0xf]
    %v360 = vld [vmem:[#allocation8 + $0x150] sm:$0xff]
    %v361 = vld [vmem:[#allocation8 + $0x158] sm:$0xff]
    %v362 = vld [vmem:[#allocation8 + $0x160] sm:$0xff]
    %v363 = vld [vmem:[#allocation8 + $0x168] sm:$0xf]
    %v364 = vld [vmem:[#allocation8 + $0x16c] sm:$0xff]
    %v365 = vld [vmem:[#allocation8 + $0x174] sm:$0xff]
    %v366 = vld [vmem:[#allocation8 + $0x17c] sm:$0xff]
    %v367 = vld [vmem:[#allocation8 + $0x184] sm:$0xf]
    %v368 = vld [vmem:[#allocation8 + $0x188] sm:$0xff]
    %v369 = vld [vmem:[#allocation8 + $0x190] sm:$0xff]
    %v370 = vld [vmem:[#allocation8 + $0x198] sm:$0xff]
    %v371 = vld [vmem:[#allocation8 + $0x1a0] sm:$0xf]
    %v372 = vld [vmem:[#allocation8 + $0x1a4] sm:$0xff]
    %v373 = vld [vmem:[#allocation8 + $0x1ac] sm:$0xff]
    %v374 = vld [vmem:[#allocation8 + $0x1b4] sm:$0xff]
    %v375 = vld [vmem:[#allocation8 + $0x1bc] sm:$0xf]
    %v376 = vld [vmem:[%s6] sm:$0xff]
    %v378 = vlaneseq
    %v379 = vshrl.u32 %v378, 7
    %v380 = vsub.s32 0, %v379
    %v381 = vrot.slane %v376, %v380
    %v382 = vlaneseq
    %v383 = vshrl.u32 %v382, 7
    %v384 = vsub.s32 1, %v383
    %v385 = vrot.slane %v376, %v384
    %v386 = vlaneseq
    %v387 = vshrl.u32 %v386, 7
    %v388 = vsub.s32 2, %v387
    %v389 = vrot.slane %v376, %v388
    %v390 = vlaneseq
    %v391 = vshrl.u32 %v390, 7
    %v392 = vsub.s32 3, %v391
    %v393 = vrot.slane %v376, %v392
    %v394 = vlaneseq
    %v395 = vshrl.u32 %v394, 7
    %v396 = vsub.s32 4, %v395
    %v397 = vrot.slane %v376, %v396
    %v398 = vlaneseq
    %v399 = vshrl.u32 %v398, 7
    %v400 = vsub.s32 5, %v399
    %v401 = vrot.slane %v376, %v400
    %v402 = vlaneseq
    %v403 = vshrl.u32 %v402, 7
    %v404 = vsub.s32 6, %v403
    %v405 = vrot.slane %v376, %v404
    %v477 = vunpack.c.l.b16 %v312
    %v478 = vunpack.c.h.b16 %v312
    %v479 = vunpack.c.l.b16 %v313
    %v480 = vunpack.c.h.b16 %v313
    %v481 = vunpack.c.l.b16 %v314
    %v482 = vunpack.c.h.b16 %v314
    %v483 = vunpack.c.l.b16 %v315
    %v484 = vunpack.c.l.b16 %v316
    %v485 = vunpack.c.h.b16 %v316
    %v486 = vunpack.c.l.b16 %v317
    %v487 = vunpack.c.h.b16 %v317
    %v488 = vunpack.c.l.b16 %v318
    %v489 = vunpack.c.h.b16 %v318
    %v490 = vunpack.c.l.b16 %v319
    %v491 = vunpack.c.l.b16 %v320
    %v492 = vunpack.c.h.b16 %v320
    %v493 = vunpack.c.l.b16 %v321
    %v494 = vunpack.c.h.b16 %v321
    %v495 = vunpack.c.l.b16 %v322
    %v496 = vunpack.c.h.b16 %v322
    %v497 = vunpack.c.l.b16 %v323
    %v498 = vunpack.c.l.b16 %v324
    %v499 = vunpack.c.h.b16 %v324
    %v500 = vunpack.c.l.b16 %v325
    %v501 = vunpack.c.h.b16 %v325
    %v502 = vunpack.c.l.b16 %v326
    %v503 = vunpack.c.h.b16 %v326
    %v504 = vunpack.c.l.b16 %v327
    %v505 = vunpack.c.l.b16 %v328
    %v506 = vunpack.c.h.b16 %v328
    %v507 = vunpack.c.l.b16 %v329
    %v508 = vunpack.c.h.b16 %v329
    %v509 = vunpack.c.l.b16 %v330
    %v510 = vunpack.c.h.b16 %v330
    %v511 = vunpack.c.l.b16 %v331
    %v512 = vunpack.c.l.b16 %v332
    %v513 = vunpack.c.h.b16 %v332
    %v514 = vunpack.c.l.b16 %v333
    %v515 = vunpack.c.h.b16 %v333
    %v516 = vunpack.c.l.b16 %v334
    %v517 = vunpack.c.h.b16 %v334
    %v518 = vunpack.c.l.b16 %v335
    %v519 = vunpack.c.l.b16 %v336
    %v520 = vunpack.c.h.b16 %v336
    %v521 = vunpack.c.l.b16 %v337
    %v522 = vunpack.c.h.b16 %v337
    %v523 = vunpack.c.l.b16 %v338
    %v524 = vunpack.c.h.b16 %v338
    %v525 = vunpack.c.l.b16 %v339
    %v526 = vunpack.c.l.b16 %v340
    %v527 = vunpack.c.h.b16 %v340
    %v528 = vunpack.c.l.b16 %v341
    %v529 = vunpack.c.h.b16 %v341
    %v530 = vunpack.c.l.b16 %v342
    %v531 = vunpack.c.h.b16 %v342
    %v532 = vunpack.c.l.b16 %v343
    %v533 = vunpack.c.l.b16 %v344
    %v534 = vunpack.c.h.b16 %v344
    %v535 = vunpack.c.l.b16 %v345
    %v536 = vunpack.c.h.b16 %v345
    %v537 = vunpack.c.l.b16 %v346
    %v538 = vunpack.c.h.b16 %v346
    %v539 = vunpack.c.l.b16 %v347
    %v540 = vunpack.c.l.b16 %v348
    %v541 = vunpack.c.h.b16 %v348
    %v542 = vunpack.c.l.b16 %v349
    %v543 = vunpack.c.h.b16 %v349
    %v544 = vunpack.c.l.b16 %v350
    %v545 = vunpack.c.h.b16 %v350
    %v546 = vunpack.c.l.b16 %v351
    %v547 = vunpack.c.l.b16 %v352
    %v548 = vunpack.c.h.b16 %v352
    %v549 = vunpack.c.l.b16 %v353
    %v550 = vunpack.c.h.b16 %v353
    %v551 = vunpack.c.l.b16 %v354
    %v552 = vunpack.c.h.b16 %v354
    %v553 = vunpack.c.l.b16 %v355
    %v554 = vunpack.c.l.b16 %v356
    %v555 = vunpack.c.h.b16 %v356
    %v556 = vunpack.c.l.b16 %v357
    %v557 = vunpack.c.h.b16 %v357
    %v558 = vunpack.c.l.b16 %v358
    %v559 = vunpack.c.h.b16 %v358
    %v560 = vunpack.c.l.b16 %v359
    %v561 = vunpack.c.l.b16 %v360
    %v562 = vunpack.c.h.b16 %v360
    %v563 = vunpack.c.l.b16 %v361
    %v564 = vunpack.c.h.b16 %v361
    %v565 = vunpack.c.l.b16 %v362
    %v566 = vunpack.c.h.b16 %v362
    %v567 = vunpack.c.l.b16 %v363
    %v568 = vunpack.c.l.b16 %v364
    %v569 = vunpack.c.h.b16 %v364
    %v570 = vunpack.c.l.b16 %v365
    %v571 = vunpack.c.h.b16 %v365
    %v572 = vunpack.c.l.b16 %v366
    %v573 = vunpack.c.h.b16 %v366
    %v574 = vunpack.c.l.b16 %v367
    %v575 = vunpack.c.l.b16 %v368
    %v576 = vunpack.c.h.b16 %v368
    %v577 = vunpack.c.l.b16 %v369
    %v578 = vunpack.c.h.b16 %v369
    %v579 = vunpack.c.l.b16 %v370
    %v580 = vunpack.c.h.b16 %v370
    %v581 = vunpack.c.l.b16 %v371
    %v582 = vunpack.c.l.b16 %v372
    %v583 = vunpack.c.h.b16 %v372
    %v584 = vunpack.c.l.b16 %v373
    %v585 = vunpack.c.h.b16 %v373
    %v586 = vunpack.c.l.b16 %v374
    %v587 = vunpack.c.h.b16 %v374
    %v588 = vunpack.c.l.b16 %v375
    %v589 = vpack.c.b16 %v484, %v477
    %v590 = vpack.c.b16 %v485, %v478
    %v591 = vpack.c.b16 %v486, %v479
    %v592 = vpack.c.b16 %v487, %v480
    %v593 = vpack.c.b16 %v488, %v481
    %v594 = vpack.c.b16 %v489, %v482
    %v595 = vpack.c.b16 %v490, %v483
    %v596 = vpack.c.b16 %v498, %v491
    %v597 = vpack.c.b16 %v499, %v492
    %v598 = vpack.c.b16 %v500, %v493
    %v599 = vpack.c.b16 %v501, %v494
    %v600 = vpack.c.b16 %v502, %v495
    %v601 = vpack.c.b16 %v503, %v496
    %v602 = vpack.c.b16 %v504, %v497
    %v603 = vpack.c.b16 %v512, %v505
    %v604 = vpack.c.b16 %v513, %v506
    %v605 = vpack.c.b16 %v514, %v507
    %v606 = vpack.c.b16 %v515, %v508
    %v607 = vpack.c.b16 %v516, %v509
    %v608 = vpack.c.b16 %v517, %v510
    %v609 = vpack.c.b16 %v518, %v511
    %v610 = vpack.c.b16 %v526, %v519
    %v611 = vpack.c.b16 %v527, %v520
    %v612 = vpack.c.b16 %v528, %v521
    %v613 = vpack.c.b16 %v529, %v522
    %v614 = vpack.c.b16 %v530, %v523
    %v615 = vpack.c.b16 %v531, %v524
    %v616 = vpack.c.b16 %v532, %v525
    %v617 = vpack.c.b16 %v540, %v533
    %v618 = vpack.c.b16 %v541, %v534
    %v619 = vpack.c.b16 %v542, %v535
    %v620 = vpack.c.b16 %v543, %v536
    %v621 = vpack.c.b16 %v544, %v537
    %v622 = vpack.c.b16 %v545, %v538
    %v623 = vpack.c.b16 %v546, %v539
    %v624 = vpack.c.b16 %v554, %v547
    %v625 = vpack.c.b16 %v555, %v548
    %v626 = vpack.c.b16 %v556, %v549
    %v627 = vpack.c.b16 %v557, %v550
    %v628 = vpack.c.b16 %v558, %v551
    %v629 = vpack.c.b16 %v559, %v552
    %v630 = vpack.c.b16 %v560, %v553
    %v631 = vpack.c.b16 %v568, %v561
    %v632 = vpack.c.b16 %v569, %v562
    %v633 = vpack.c.b16 %v570, %v563
    %v634 = vpack.c.b16 %v571, %v564
    %v635 = vpack.c.b16 %v572, %v565
    %v636 = vpack.c.b16 %v573, %v566
    %v637 = vpack.c.b16 %v574, %v567
    %v638 = vpack.c.b16 %v582, %v575
    %v639 = vpack.c.b16 %v583, %v576
    %v640 = vpack.c.b16 %v584, %v577
    %v641 = vpack.c.b16 %v585, %v578
    %v642 = vpack.c.b16 %v586, %v579
    %v643 = vpack.c.b16 %v587, %v580
    %v644 = vpack.c.b16 %v588, %v581
    %701 = vmatprep.subr.bf16.mxu0 %v590
    %702 = vmatpush1.bf16.msra.mxu0 %v589
    %703 = vmatprep.subr.bf16.mxu0 %v597
    %704 = vmatpush1.bf16.msra.mxu0 %v596
    %705 = vmatprep.subr.bf16.mxu0 %v604
    %706 = vmatpush1.bf16.msra.mxu0 %v603
    %707 = vmatprep.subr.bf16.mxu0 %v611
    %708 = vmatpush1.bf16.msra.mxu0 %v610
    %709 = vmatprep.subr.bf16.mxu0 %v618
    %710 = vmatpush1.bf16.msra.mxu0 %v617
    %711 = vmatprep.subr.bf16.mxu0 %v625
    %712 = vmatpush1.bf16.msra.mxu0 %v624
    %713 = vmatprep.subr.bf16.mxu0 %v632
    %714 = vmatpush1.bf16.msra.mxu0 %v631
    %715 = vmatprep.subr.bf16.mxu0 %v639
    %716 = vmatpush1.bf16.msra.mxu0 %v638
    %717 = vmatprep.subr.bf16.mxu0 0
    %718 = vmatpush1.bf16.msra.mxu0 0
    %719 = vmatprep.subr.bf16.mxu0 0
    %720 = vmatpush1.bf16.msra.mxu0 0
    %721 = vmatprep.subr.bf16.mxu0 0
    %722 = vmatpush1.bf16.msra.mxu0 0
    %723 = vmatprep.subr.bf16.mxu0 0
    %724 = vmatpush1.bf16.msra.mxu0 0
    %725 = vmatprep.subr.bf16.mxu0 0
    %726 = vmatpush1.bf16.msra.mxu0 0
    %727 = vmatprep.subr.bf16.mxu0 0
    %728 = vmatpush1.bf16.msra.mxu0 0
    %729 = vmatprep.subr.bf16.mxu0 0
    %730 = vmatpush1.bf16.msra.mxu0 0
    %731 = vmatprep.subr.bf16.mxu0 0
    %732 = vmatpush1.bf16.msra.mxu0 0
    %733 = vmatprep.mubr.bf16.mxu0 0
    %734 = vmatmul.mubr.bf16.gmra.mrb[0].mxu0 %v311
    %v735 = vpop.f32.mrb[0].mxu0
    %v736 = vadd.f32 %v381, %v735
    %v737 = vpop.f32.mrb[0].mxu0
    %v738 = vadd.f32 %v385, %v737
    %v739 = vpop.f32.mrb[0].mxu0
    %v740 = vpop.f32.mrb[0].mxu0
    %741 = vdwg.mxu0
    %742 = vmatprep.subr.bf16.mxu0 %v592
    %743 = vmatpush1.bf16.msra.mxu0 %v591
    %744 = vmatprep.subr.bf16.mxu0 %v599
    %745 = vmatpush1.bf16.msra.mxu0 %v598
    %746 = vmatprep.subr.bf16.mxu0 %v606
    %747 = vmatpush1.bf16.msra.mxu0 %v605
    %748 = vmatprep.subr.bf16.mxu0 %v613
    %749 = vmatpush1.bf16.msra.mxu0 %v612
    %750 = vmatprep.subr.bf16.mxu0 %v620
    %751 = vmatpush1.bf16.msra.mxu0 %v619
    %752 = vmatprep.subr.bf16.mxu0 %v627
    %753 = vmatpush1.bf16.msra.mxu0 %v626
    %754 = vmatprep.subr.bf16.mxu0 %v634
    %755 = vmatpush1.bf16.msra.mxu0 %v633
    %756 = vmatprep.subr.bf16.mxu0 %v641
    %757 = vmatpush1.bf16.msra.mxu0 %v640
    %758 = vmatprep.subr.bf16.mxu0 0
    %759 = vmatpush1.bf16.msra.mxu0 0
    %760 = vmatprep.subr.bf16.mxu0 0
    %761 = vmatpush1.bf16.msra.mxu0 0
    %762 = vmatprep.subr.bf16.mxu0 0
    %763 = vmatpush1.bf16.msra.mxu0 0
    %764 = vmatprep.subr.bf16.mxu0 0
    %765 = vmatpush1.bf16.msra.mxu0 0
    %766 = vmatprep.subr.bf16.mxu0 0
    %767 = vmatpush1.bf16.msra.mxu0 0
    %768 = vmatprep.subr.bf16.mxu0 0
    %769 = vmatpush1.bf16.msra.mxu0 0
    %770 = vmatprep.subr.bf16.mxu0 0
    %771 = vmatpush1.bf16.msra.mxu0 0
    %772 = vmatprep.subr.bf16.mxu0 0
    %773 = vmatpush1.bf16.msra.mxu0 0
    %774 = vmatprep.mubr.bf16.mxu0 0
    %775 = vmatmul.mubr.bf16.gmra.mrb[0].mxu0 %v311
    %v776 = vpop.f32.mrb[0].mxu0
    %v777 = vadd.f32 %v389, %v776
    %v778 = vpop.f32.mrb[0].mxu0
    %v779 = vadd.f32 %v393, %v778
    %v780 = vpop.f32.mrb[0].mxu0
    %v781 = vpop.f32.mrb[0].mxu0
    %782 = vdwg.mxu0
    %783 = vmatprep.subr.bf16.mxu0 %v594
    %784 = vmatpush1.bf16.msra.mxu0 %v593
    %785 = vmatprep.subr.bf16.mxu0 %v601
    %786 = vmatpush1.bf16.msra.mxu0 %v600
    %787 = vmatprep.subr.bf16.mxu0 %v608
    %788 = vmatpush1.bf16.msra.mxu0 %v607
    %789 = vmatprep.subr.bf16.mxu0 %v615
    %790 = vmatpush1.bf16.msra.mxu0 %v614
    %791 = vmatprep.subr.bf16.mxu0 %v622
    %792 = vmatpush1.bf16.msra.mxu0 %v621
    %793 = vmatprep.subr.bf16.mxu0 %v629
    %794 = vmatpush1.bf16.msra.mxu0 %v628
    %795 = vmatprep.subr.bf16.mxu0 %v636
    %796 = vmatpush1.bf16.msra.mxu0 %v635
    %797 = vmatprep.subr.bf16.mxu0 %v643
    %798 = vmatpush1.bf16.msra.mxu0 %v642
    %799 = vmatprep.subr.bf16.mxu0 0
    %800 = vmatpush1.bf16.msra.mxu0 0
    %801 = vmatprep.subr.bf16.mxu0 0
    %802 = vmatpush1.bf16.msra.mxu0 0
    %803 = vmatprep.subr.bf16.mxu0 0
    %804 = vmatpush1.bf16.msra.mxu0 0
    %805 = vmatprep.subr.bf16.mxu0 0
    %806 = vmatpush1.bf16.msra.mxu0 0
    %807 = vmatprep.subr.bf16.mxu0 0
    %808 = vmatpush1.bf16.msra.mxu0 0
    %809 = vmatprep.subr.bf16.mxu0 0
    %810 = vmatpush1.bf16.msra.mxu0 0
    %811 = vmatprep.subr.bf16.mxu0 0
    %812 = vmatpush1.bf16.msra.mxu0 0
    %813 = vmatprep.subr.bf16.mxu0 0
    %814 = vmatpush1.bf16.msra.mxu0 0
    %815 = vmatprep.mubr.bf16.mxu0 0
    %816 = vmatmul.mubr.bf16.gmra.mrb[0].mxu0 %v311
    %v817 = vpop.f32.mrb[0].mxu0
    %v818 = vadd.f32 %v397, %v817
    %v819 = vpop.f32.mrb[0].mxu0
    %v820 = vadd.f32 %v401, %v819
    %v821 = vpop.f32.mrb[0].mxu0
    %v822 = vpop.f32.mrb[0].mxu0
    %823 = vdwg.mxu0
    %824 = vmatprep.subr.bf16.mxu0 0
    %825 = vmatpush1.bf16.msra.mxu0 %v595
    %826 = vmatprep.subr.bf16.mxu0 0
    %827 = vmatpush1.bf16.msra.mxu0 %v602
    %828 = vmatprep.subr.bf16.mxu0 0
    %829 = vmatpush1.bf16.msra.mxu0 %v609
    %830 = vmatprep.subr.bf16.mxu0 0
    %831 = vmatpush1.bf16.msra.mxu0 %v616
    %832 = vmatprep.subr.bf16.mxu0 0
    %833 = vmatpush1.bf16.msra.mxu0 %v623
    %834 = vmatprep.subr.bf16.mxu0 0
    %835 = vmatpush1.bf16.msra.mxu0 %v630
    %836 = vmatprep.subr.bf16.mxu0 0
    %837 = vmatpush1.bf16.msra.mxu0 %v637
    %838 = vmatprep.subr.bf16.mxu0 0
    %839 = vmatpush1.bf16.msra.mxu0 %v644
    %840 = vmatprep.subr.bf16.mxu0 0
    %841 = vmatpush1.bf16.msra.mxu0 0
    %842 = vmatprep.subr.bf16.mxu0 0
    %843 = vmatpush1.bf16.msra.mxu0 0
    %844 = vmatprep.subr.bf16.mxu0 0
    %845 = vmatpush1.bf16.msra.mxu0 0
    %846 = vmatprep.subr.bf16.mxu0 0
    %847 = vmatpush1.bf16.msra.mxu0 0
    %848 = vmatprep.subr.bf16.mxu0 0
    %849 = vmatpush1.bf16.msra.mxu0 0
    %850 = vmatprep.subr.bf16.mxu0 0
    %851 = vmatpush1.bf16.msra.mxu0 0
    %852 = vmatprep.subr.bf16.mxu0 0
    %853 = vmatpush1.bf16.msra.mxu0 0
    %854 = vmatprep.subr.bf16.mxu0 0
    %855 = vmatpush1.bf16.msra.mxu0 0
    %856 = vmatprep.mubr.bf16.mxu0 0
    %857 = vmatmul.mubr.bf16.gmra.mrb[0].mxu0 %v311
    %v858 = vpop.f32.mrb[0].mxu0
    %v859 = vadd.f32 %v405, %v858
    %v860 = vpop.f32.mrb[0].mxu0
    %v861 = vpop.f32.mrb[0].mxu0
    %v862 = vpop.f32.mrb[0].mxu0
    %863 = vdwg.mxu0
    %v864 = vtanh.pop %v736
    %v865 = vtanh.pop %v738
    %v866 = vtanh.pop %v777
    %v867 = vtanh.pop %v779
    %v868 = vtanh.pop %v818
    %v869 = vtanh.pop %v820
    %v870 = vtanh.pop %v859
    %871 = vst [vmem:[#allocation10] sm:$0xff] %v864
    %872 = vst [vmem:[#allocation10 + $0x8] sm:$0xff] %v865
    %873 = vst [vmem:[#allocation10 + $0x10] sm:$0xff] %v866
    %874 = vst [vmem:[#allocation10 + $0x18] sm:$0xff] %v867
    %875 = vst [vmem:[#allocation10 + $0x20] sm:$0xff] %v868
    %876 = vst [vmem:[#allocation10 + $0x28] sm:$0xff] %v869
    %877 = vst [vmem:[#allocation10 + $0x30] sm:$0xff] %v870
    // Predicated region
    $region46: #{tpu_custom_call.1} parent=1 // pred_check
      _
    $region47: #{tpu_custom_call.1} parent=1 // pred_check_branch
      %879 = sbr.rel (0) target = $region49
    $region48: #{tpu_custom_call.1} parent=1 // pred_region
      %s881 = ssub.s32 896, 896
      %882 = vsyncadd [#allocation4], %s881
      %s884 = sshll.u32 [#allocation10], 4
      %s885 = int_to_ptr.vmem [resolvable:$true] %s884
      %887 = dma.vmem_to_hbm [thread:$0]  %s885, 896, %s7, [#allocation4]
    $region49: #{tpu_custom_call.1} parent=1 // pred_fallthru
      _
    // Predicated region
    $region50: #{tpu_custom_call.1} parent=1 // pred_check
      _
    $region51: #{tpu_custom_call.1} parent=1 // pred_check_branch
      %889 = sbr.rel (0) target = $region53
    $region52: #{tpu_custom_call.1} parent=1 // pred_region
      %890 = dma.done [#allocation4], 896
    $region53: #{tpu_custom_call.1} parent=1 // pred_fallthru
      _
    %891 = vsyncpa [#allocation3], 1
    %892 = vsyncpa [#allocation6], 1
    %893 = vsyncpa [#allocation9], 1
    %894 = vsyncpa [#allocation4], 1

</llo_original>
